<compile_context>
chip_gen: v7x
topology: tpu7x:2x2x1
jax: 0.10.0
libtpu: 0.0.40
codegen_flags: <defaults>
</compile_context>

<pallas_src>
import jax
import jax.numpy as jnp
import numpy as np
from jax.experimental import pallas as pl
from jax.experimental.pallas import tpu as pltpu


def make_wff_kernel(num_f, fuse_transpose):
    """Build the fusion kernel for a static number of features."""

    def kernel(*refs):
        feat_refs = refs[:num_f]                      # each (1, HW, C)
        w1_ref, b1_ref, w2_ref, b2_ref, w3_ref, b3_ref, out_ref = refs[num_f:]

        # f = sum(features), accumulated in f32 straight from the refs
        # (no list of f32 feature copies kept live across the kernel).
        f_sum = feat_refs[0][0].astype(jnp.float32)   # (HW, C)
        for r in feat_refs[1:]:
            f_sum = f_sum + r[0].astype(jnp.float32)

        hw = f_sum.shape[0]
        # GAP over the H*W tokens on the MXU (keeps the XLU free for the
        # fused transpose): (1, HW) @ (HW, C) -> (1, C).
        ones_row = jnp.full((1, hw), 1.0 / hw, dtype=jnp.float32)
        gap = jnp.dot(ones_row, f_sum, preferred_element_type=jnp.float32)

        # MLP: Linear -> Sigmoid -> Linear -> ReLU -> Linear.
        h1 = jax.nn.sigmoid(
            jnp.dot(gap, w1_ref[...].astype(jnp.float32),
                    preferred_element_type=jnp.float32)
            + b1_ref[...].astype(jnp.float32))                        # (1, C//2)
        h2 = jax.nn.relu(
            jnp.dot(h1, w2_ref[...].astype(jnp.float32),
                    preferred_element_type=jnp.float32)
            + b2_ref[...].astype(jnp.float32))                        # (1, C//2)
        logits = (jnp.dot(h2, w3_ref[...].astype(jnp.float32),
                          preferred_element_type=jnp.float32)
                  + b3_ref[...].astype(jnp.float32))                  # (1, F)

        # Softmax over the F features (exact reciprocal -> 1e-5 tolerance).
        m = jnp.max(logits, axis=-1, keepdims=True)
        e = jnp.exp(logits - m)
        weight = e * pl.reciprocal(jnp.sum(e, axis=-1, keepdims=True))  # (1, F)

        # Per-feature scalars extracted once, outside the unrolled loop.
        ws = [weight[0, i] for i in range(num_f)]

        # Weighted sum over the F features; features re-read from VMEM refs
        # (cheap vld, keeps live ranges short).
        acc = ws[0] * feat_refs[0][0].astype(jnp.float32)
        for i in range(1, num_f):
            acc = acc + ws[i] * feat_refs[i][0].astype(jnp.float32)   # (HW, C)

        if fuse_transpose:
            # HW is a multiple of 128: store lane-dense (C, HW).  Cast to the
            # (possibly 16-bit) output dtype *before* the XLU transpose so the
            # transpose moves packed data.
            out_ref[0] = jnp.transpose(acc.astype(out_ref.dtype))     # (C, HW)
        else:
            out_ref[0] = acc.astype(out_ref.dtype)                    # (HW, C)

    return kernel


def _round_up(x, m):
    return ((x + m - 1) // m) * m


def _vmem_budget(num_f, HW, C, in_dtype, out_dtype, params, fuse_transpose):
    """Scoped-VMEM request with (8,128) tile padding and per-chip caps."""
    in_bytes = jnp.dtype(in_dtype).itemsize
    out_bytes = jnp.dtype(out_dtype).itemsize

    # Padded (sublane, lane) footprint of each pipelined block.
    in_block = _round_up(HW, 8) * _round_up(C, 128) * in_bytes
    if fuse_transpose:
        out_block = _round_up(C, 8) * _round_up(HW, 128) * out_bytes
    else:
        out_block = _round_up(HW, 8) * _round_up(C, 128) * out_bytes

    # In-kernel f32 intermediates: f_sum + acc (+ transpose temp when fused).
    f32_tile = _round_up(HW, 8) * _round_up(C, 128) * 4
    temps = (2 + (1 if fuse_transpose else 0)) * f32_tile

    param_bytes = sum(
        _round_up(p.shape[0], 8) * _round_up(p.shape[1], 128)
        * jnp.dtype(p.dtype).itemsize
        for p in params)

    # F inputs + 1 output double-buffered, params double-buffered, temps,
    # plus ~2 MiB slack for compiler-internal scratch / semaphores.
    need = (2 * num_f * in_block + 2 * out_block + 2 * param_bytes
            + temps + (2 << 20))

    # Per-generation cap: physical VMEM minus headroom, never above ~110 MiB
    # (v5e/v6e have 128 MiB; v7x has only 64 MiB per TensorCore -> ~52 MiB).
    try:
        phys = int(pltpu.get_tpu_info().vmem_capacity_bytes)
    except Exception:
        phys = 64 << 20   # conservative fallback (v7x-sized)
    cap = max(min(phys - (12 << 20), 110 << 20), 16 << 20)
    return int(min(max(need, 8 << 20), cap))


def weighted_feature_fusion(features, params, h, w):
    """features: list of num_f arrays of shape (B, H*W, C). Returns (B, C, H, W)."""
    num_f = len(features)
    B, HW, C = features[0].shape
    w1, b1, w2, b2, w3, b3 = params
    dtype = features[0].dtype

    # Fuse the NHWC->NCHW transpose into the kernel only when the resulting
    # last dim (HW) is lane-dense; otherwise keep (HW, C) stores and let XLA
    # do the transpose outside.
    fuse_transpose = (HW % 128 == 0)

    kernel = make_wff_kernel(num_f, fuse_transpose)

    feat_specs = [
        pl.BlockSpec((1, HW, C), lambda b: (b, 0, 0)) for _ in range(num_f)
    ]
    param_specs = [
        pl.BlockSpec(p.shape, lambda b: (0, 0)) for p in (w1, b1, w2, b2, w3, b3)
    ]

    if fuse_transpose:
        out_shape = jax.ShapeDtypeStruct((B, C, HW), dtype)
        out_spec = pl.BlockSpec((1, C, HW), lambda b: (b, 0, 0))
    else:
        out_shape = jax.ShapeDtypeStruct((B, HW, C), dtype)
        out_spec = pl.BlockSpec((1, HW, C), lambda b: (b, 0, 0))

    vmem_bytes = _vmem_budget(num_f, HW, C, dtype, dtype, params, fuse_transpose)

    out = pl.pallas_call(
        kernel,
        out_shape=out_shape,
        grid_spec=pltpu.PrefetchScalarGridSpec(
            num_scalar_prefetch=0,
            grid=(B,),
            in_specs=feat_specs + param_specs,
            out_specs=out_spec,
        ),
        compiler_params=pltpu.CompilerParams(
            dimension_semantics=("parallel",),
            vmem_limit_bytes=vmem_bytes,
        ),
    )(*features, w1, b1, w2, b2, w3, b3)

    if fuse_transpose:
        # 'b c (h w) -> b c h w' : pure reshape, no HBM transpose.
        return out.reshape(B, C, h, w)
    # 'b (h w) c -> b c h w' : lane-sparse HW case, transpose outside.
    return out.reshape(B, h, w, C).transpose(0, 3, 1, 2)


def reference(features, params, h, w):
    """Pure-JAX reference mirroring the PyTorch forward (f32)."""
    f_g = jnp.stack(features, axis=1)                 # (B, F, HW, C)
    f = sum(features)                                 # (B, HW, C)
    gap = jnp.mean(f, axis=1)                         # (B, C)  == AdaptiveAvgPool2d((1,1))
    w1, b1, w2, b2, w3, b3 = params
    h1 = jax.nn.sigmoid(gap @ w1 + b1)
    h2 = jax.nn.relu(h1 @ w2 + b2)
    logits = h2 @ w3 + b3
    wt = jax.nn.softmax(logits, axis=1)               # (B, F)
    out = jnp.sum(wt[:, :, None, None] * f_g, axis=1) # (B, HW, C)
    B, HW, C = out.shape
    return out.reshape(B, h, w, C).transpose(0, 3, 1, 2)


def init_params(key, in_channels, num_f):
    """Deterministic init (PyTorch-Linear-style uniform), weights stored as (in, out)."""
    half = in_channels // 2
    keys = jax.random.split(key, 6)

    def lin(kw, kb, fan_in, fan_out):
        bound = 1.0 / np.sqrt(fan_in)
        W = jax.random.uniform(kw, (fan_in, fan_out), jnp.float32, -bound, bound)
        b = jax.random.uniform(kb, (1, fan_out), jnp.float32, -bound, bound)
        return W, b

    w1, b1 = lin(keys[0], keys[1], in_channels, half)
    w2, b2 = lin(keys[2], keys[3], half, half)
    w3, b3 = lin(keys[4], keys[5], half, num_f)
    return (w1, b1, w2, b2, w3, b3)


def run_case(B, C, H, W, num_f, dtype, rtol, atol, key):
    HW = H * W
    pkey, fkey = jax.random.split(key)
    params = init_params(pkey, C, num_f)
    fkeys = jax.random.split(fkey, num_f)
    features = [
        jax.random.normal(fkeys[i], (B, HW, C), jnp.float32).astype(dtype)
        for i in range(num_f)
    ]

    out = weighted_feature_fusion(features, params, H, W)
    out = jax.block_until_ready(out)
    assert out.shape == (B, C, H, W)
    assert out.dtype == jnp.dtype(dtype)

    ref = reference([f.astype(jnp.float32) for f in features], params, H, W)
    np.testing.assert_allclose(
        np.asarray(out.astype(jnp.float32)), np.asarray(ref), rtol=rtol, atol=atol)


if __name__ == "__main__":
    key = jax.random.PRNGKey(0)
    k1, k2, k3 = jax.random.split(key, 3)

    # Module-default shape: HW = 64 (lane-sparse -> transpose outside kernel).
    run_case(B=2, C=32, H=8, W=8, num_f=4, dtype=jnp.float32,
             rtol=1e-5, atol=1e-5, key=k1)
    # HW = 256 (multiple of 128) -> fused lane-dense (C, HW) transpose path.
    run_case(B=2, C=32, H=16, W=16, num_f=4, dtype=jnp.float32,
             rtol=1e-5, atol=1e-5, key=k2)
    # bf16 ingestion / bf16 output (f32 internal accumulation) -> half the HBM
    # traffic on this memory-bound kernel.
    run_case(B=2, C=32, H=8, W=8, num_f=4, dtype=jnp.bfloat16,
             rtol=5e-2, atol=5e-2, key=k3)

    print("KERNEL_OK")
</pallas_src>

<mosaic_0001>
module attributes {stable_mosaic.version = 11 : i64} {
  func.func @kernel(%arg0: i32, %arg1: memref<1x64x32xf32, #tpu.memory_space<vmem>>, %arg2: memref<1x64x32xf32, #tpu.memory_space<vmem>>, %arg3: memref<1x64x32xf32, #tpu.memory_space<vmem>>, %arg4: memref<1x64x32xf32, #tpu.memory_space<vmem>>, %arg5: memref<32x16xf32, #tpu.memory_space<vmem>>, %arg6: memref<1x16xf32, #tpu.memory_space<vmem>>, %arg7: memref<16x16xf32, #tpu.memory_space<vmem>>, %arg8: memref<1x16xf32, #tpu.memory_space<vmem>>, %arg9: memref<16x4xf32, #tpu.memory_space<vmem>>, %arg10: memref<1x4xf32, #tpu.memory_space<vmem>>, %arg11: memref<1x64x32xf32, #tpu.memory_space<vmem>>) attributes {dimension_semantics = [#tpu.dimension_semantics<parallel>], iteration_bounds = array<i64: 2>, scalar_prefetch = 0 : i64, scratch_operands = 0 : i64, tpu.core_type = #tpu.core_type<tc>, window_params = [{transform_indices = @transform_0, window_bounds = array<i64: 1, 64, 32>}, {transform_indices = @transform_1, window_bounds = array<i64: 1, 64, 32>}, {transform_indices = @transform_2, window_bounds = array<i64: 1, 64, 32>}, {transform_indices = @transform_3, window_bounds = array<i64: 1, 64, 32>}, {pipeline_mode = #tpu.pipeline_mode<synchronous>, transform_indices = @transform_4, window_bounds = array<i64: 32, 16>}, {pipeline_mode = #tpu.pipeline_mode<synchronous>, transform_indices = @transform_5, window_bounds = array<i64: 1, 16>}, {pipeline_mode = #tpu.pipeline_mode<synchronous>, transform_indices = @transform_6, window_bounds = array<i64: 16, 16>}, {pipeline_mode = #tpu.pipeline_mode<synchronous>, transform_indices = @transform_7, window_bounds = array<i64: 1, 16>}, {pipeline_mode = #tpu.pipeline_mode<synchronous>, transform_indices = @transform_8, window_bounds = array<i64: 16, 4>}, {pipeline_mode = #tpu.pipeline_mode<synchronous>, transform_indices = @transform_9, window_bounds = array<i64: 1, 4>}, {transform_indices = @transform_10, window_bounds = array<i64: 1, 64, 32>}]} {
    %c0 = arith.constant 0 : index
    %c0_0 = arith.constant 0 : index
    %c0_1 = arith.constant 0 : index
    %0 = vector.load %arg1[%c0, %c0_0, %c0_1] : memref<1x64x32xf32, #tpu.memory_space<vmem>>, vector<1x64x32xf32>
    %1 = vector.shape_cast %0 : vector<1x64x32xf32> to vector<64x32xf32>
    %c0_2 = arith.constant 0 : index
    %c0_3 = arith.constant 0 : index
    %c0_4 = arith.constant 0 : index
    %2 = vector.load %arg2[%c0_2, %c0_3, %c0_4] : memref<1x64x32xf32, #tpu.memory_space<vmem>>, vector<1x64x32xf32>
    %3 = vector.shape_cast %2 : vector<1x64x32xf32> to vector<64x32xf32>
    %4 = arith.addf %1, %3 : vector<64x32xf32>
    %c0_5 = arith.constant 0 : index
    %c0_6 = arith.constant 0 : index
    %c0_7 = arith.constant 0 : index
    %5 = vector.load %arg3[%c0_5, %c0_6, %c0_7] : memref<1x64x32xf32, #tpu.memory_space<vmem>>, vector<1x64x32xf32>
    %6 = vector.shape_cast %5 : vector<1x64x32xf32> to vector<64x32xf32>
    %7 = arith.addf %4, %6 : vector<64x32xf32>
    %c0_8 = arith.constant 0 : index
    %c0_9 = arith.constant 0 : index
    %c0_10 = arith.constant 0 : index
    %8 = vector.load %arg4[%c0_8, %c0_9, %c0_10] : memref<1x64x32xf32, #tpu.memory_space<vmem>>, vector<1x64x32xf32>
    %9 = vector.shape_cast %8 : vector<1x64x32xf32> to vector<64x32xf32>
    %10 = arith.addf %7, %9 : vector<64x32xf32>
    %cst = arith.constant 1.562500e-02 : f32
    %11 = vector.broadcast %cst : f32 to vector<1x64xf32>
    %cst_11 = arith.constant dense<0.000000e+00> : vector<1x32xf32>
    %12 = tpu.matmul %11, %10, %cst_11 {dimension_numbers = #tpu.dot_dimension_numbers<[1], [0], [0], [1], [0, 0, 1, 1], [], []>} : vector<1x64xf32>, vector<64x32xf32>, vector<1x32xf32> -> vector<1x32xf32>
    %c0_12 = arith.constant 0 : index
    %c0_13 = arith.constant 0 : index
    %13 = vector.load %arg5[%c0_12, %c0_13] : memref<32x16xf32, #tpu.memory_space<vmem>>, vector<32x16xf32>
    %cst_14 = arith.constant dense<0.000000e+00> : vector<1x16xf32>
    %14 = tpu.matmul %12, %13, %cst_14 {dimension_numbers = #tpu.dot_dimension_numbers<[1], [0], [0], [1], [0, 0, 1, 1], [], []>} : vector<1x32xf32>, vector<32x16xf32>, vector<1x16xf32> -> vector<1x16xf32>
    %c0_15 = arith.constant 0 : index
    %c0_16 = arith.constant 0 : index
    %15 = vector.load %arg6[%c0_15, %c0_16] : memref<1x16xf32, #tpu.memory_space<vmem>>, vector<1x16xf32>
    %16 = arith.addf %14, %15 : vector<1x16xf32>
    %17 = arith.negf %16 : vector<1x16xf32>
    %18 = math.exp %17 : vector<1x16xf32>
    %cst_17 = arith.constant 1.000000e+00 : f32
    %19 = vector.broadcast %cst_17 : f32 to vector<1x16xf32>
    %20 = arith.addf %19, %18 : vector<1x16xf32>
    %21 = arith.divf %19, %20 : vector<1x16xf32>
    %c0_18 = arith.constant 0 : index
    %c0_19 = arith.constant 0 : index
    %22 = vector.load %arg7[%c0_18, %c0_19] : memref<16x16xf32, #tpu.memory_space<vmem>>, vector<16x16xf32>
    %cst_20 = arith.constant dense<0.000000e+00> : vector<1x16xf32>
    %23 = tpu.matmul %21, %22, %cst_20 {dimension_numbers = #tpu.dot_dimension_numbers<[1], [0], [0], [1], [0, 0, 1, 1], [], []>} : vector<1x16xf32>, vector<16x16xf32>, vector<1x16xf32> -> vector<1x16xf32>
    %c0_21 = arith.constant 0 : index
    %c0_22 = arith.constant 0 : index
    %24 = vector.load %arg8[%c0_21, %c0_22] : memref<1x16xf32, #tpu.memory_space<vmem>>, vector<1x16xf32>
    %25 = arith.addf %23, %24 : vector<1x16xf32>
    %cst_23 = arith.constant 0.000000e+00 : f32
    %26 = vector.broadcast %cst_23 : f32 to vector<1x16xf32>
    %27 = arith.maximumf %25, %26 : vector<1x16xf32>
    %c0_24 = arith.constant 0 : index
    %c0_25 = arith.constant 0 : index
    %28 = vector.load %arg9[%c0_24, %c0_25] : memref<16x4xf32, #tpu.memory_space<vmem>>, vector<16x4xf32>
    %cst_26 = arith.constant dense<0.000000e+00> : vector<1x4xf32>
    %29 = tpu.matmul %27, %28, %cst_26 {dimension_numbers = #tpu.dot_dimension_numbers<[1], [0], [0], [1], [0, 0, 1, 1], [], []>} : vector<1x16xf32>, vector<16x4xf32>, vector<1x4xf32> -> vector<1x4xf32>
    %c0_27 = arith.constant 0 : index
    %c0_28 = arith.constant 0 : index
    %30 = vector.load %arg10[%c0_27, %c0_28] : memref<1x4xf32, #tpu.memory_space<vmem>>, vector<1x4xf32>
    %31 = arith.addf %29, %30 : vector<1x4xf32>
    %cst_29 = arith.constant dense<0xFF800000> : vector<1xf32>
    %32 = vector.multi_reduction <maximumf>, %31, %cst_29 [1] : vector<1x4xf32> to vector<1xf32>
    %33 = vector.shape_cast %32 : vector<1xf32> to vector<1x1xf32>
    %34 = vector.broadcast %33 : vector<1x1xf32> to vector<1x4xf32>
    %35 = arith.subf %31, %34 : vector<1x4xf32>
    %36 = math.exp %35 : vector<1x4xf32>
    %cst_30 = arith.constant dense<0.000000e+00> : vector<1xf32>
    %37 = vector.multi_reduction <add>, %36, %cst_30 [1] : vector<1x4xf32> to vector<1xf32>
    %38 = vector.shape_cast %37 : vector<1xf32> to vector<1x1xf32>
    %39 = tpu.reciprocal %38 : vector<1x1xf32> -> vector<1x1xf32>
    %40 = vector.broadcast %39 : vector<1x1xf32> to vector<1x4xf32>
    %41 = arith.mulf %36, %40 : vector<1x4xf32>
    %42 = vector.extract_strided_slice %41 {offsets = [0, 0], sizes = [1, 1], strides = [1, 1]} : vector<1x4xf32> to vector<1x1xf32>
    %43 = vector.extract %42[0, 0] : f32 from vector<1x1xf32>
    %44 = vector.extract_strided_slice %41 {offsets = [0, 1], sizes = [1, 1], strides = [1, 1]} : vector<1x4xf32> to vector<1x1xf32>
    %45 = vector.extract %44[0, 0] : f32 from vector<1x1xf32>
    %46 = vector.extract_strided_slice %41 {offsets = [0, 2], sizes = [1, 1], strides = [1, 1]} : vector<1x4xf32> to vector<1x1xf32>
    %47 = vector.extract %46[0, 0] : f32 from vector<1x1xf32>
    %48 = vector.extract_strided_slice %41 {offsets = [0, 3], sizes = [1, 1], strides = [1, 1]} : vector<1x4xf32> to vector<1x1xf32>
    %49 = vector.extract %48[0, 0] : f32 from vector<1x1xf32>
    %c0_31 = arith.constant 0 : index
    %c0_32 = arith.constant 0 : index
    %c0_33 = arith.constant 0 : index
    %50 = vector.load %arg1[%c0_31, %c0_32, %c0_33] : memref<1x64x32xf32, #tpu.memory_space<vmem>>, vector<1x64x32xf32>
    %51 = vector.shape_cast %50 : vector<1x64x32xf32> to vector<64x32xf32>
    %52 = vector.broadcast %43 : f32 to vector<64x32xf32>
    %53 = arith.mulf %52, %51 : vector<64x32xf32>
    %c0_34 = arith.constant 0 : index
    %c0_35 = arith.constant 0 : index
    %c0_36 = arith.constant 0 : index
    %54 = vector.load %arg2[%c0_34, %c0_35, %c0_36] : memref<1x64x32xf32, #tpu.memory_space<vmem>>, vector<1x64x32xf32>
    %55 = vector.shape_cast %54 : vector<1x64x32xf32> to vector<64x32xf32>
    %56 = vector.broadcast %45 : f32 to vector<64x32xf32>
    %57 = arith.mulf %56, %55 : vector<64x32xf32>
    %58 = arith.addf %53, %57 : vector<64x32xf32>
    %c0_37 = arith.constant 0 : index
    %c0_38 = arith.constant 0 : index
    %c0_39 = arith.constant 0 : index
    %59 = vector.load %arg3[%c0_37, %c0_38, %c0_39] : memref<1x64x32xf32, #tpu.memory_space<vmem>>, vector<1x64x32xf32>
    %60 = vector.shape_cast %59 : vector<1x64x32xf32> to vector<64x32xf32>
    %61 = vector.broadcast %47 : f32 to vector<64x32xf32>
    %62 = arith.mulf %61, %60 : vector<64x32xf32>
    %63 = arith.addf %58, %62 : vector<64x32xf32>
    %c0_40 = arith.constant 0 : index
    %c0_41 = arith.constant 0 : index
    %c0_42 = arith.constant 0 : index
    %64 = vector.load %arg4[%c0_40, %c0_41, %c0_42] : memref<1x64x32xf32, #tpu.memory_space<vmem>>, vector<1x64x32xf32>
    %65 = vector.shape_cast %64 : vector<1x64x32xf32> to vector<64x32xf32>
    %66 = vector.broadcast %49 : f32 to vector<64x32xf32>
    %67 = arith.mulf %66, %65 : vector<64x32xf32>
    %68 = arith.addf %63, %67 : vector<64x32xf32>
    %c0_43 = arith.constant 0 : index
    %c0_44 = arith.constant 0 : index
    %c0_45 = arith.constant 0 : index
    %69 = vector.load %arg11[%c0_43, %c0_44, %c0_45] : memref<1x64x32xf32, #tpu.memory_space<vmem>>, vector<1x64x32xf32>
    %70 = vector.shape_cast %69 : vector<1x64x32xf32> to vector<64x32xf32>
    %71 = vector.shape_cast %68 : vector<64x32xf32> to vector<1x64x32xf32>
    tpu.vector_store %arg11[%c0_43, %c0_44, %c0_45], %71 {strides = array<i32>} : memref<1x64x32xf32, #tpu.memory_space<vmem>>, vector<1x64x32xf32>,
    return
  }
  func.func @transform_0(%arg0: i32) -> (i32, i32, i32) {
    %c0_i32 = arith.constant 0 : i32
    %c0_i32_0 = arith.constant 0 : i32
    %c0_i32_1 = arith.constant 0 : i32
    return %arg0, %c0_i32, %c0_i32_0 : i32, i32, i32
  }
  func.func @transform_1(%arg0: i32) -> (i32, i32, i32) {
    %c0_i32 = arith.constant 0 : i32
    %c0_i32_0 = arith.constant 0 : i32
    %c0_i32_1 = arith.constant 0 : i32
    return %arg0, %c0_i32, %c0_i32_0 : i32, i32, i32
  }
  func.func @transform_2(%arg0: i32) -> (i32, i32, i32) {
    %c0_i32 = arith.constant 0 : i32
    %c0_i32_0 = arith.constant 0 : i32
    %c0_i32_1 = arith.constant 0 : i32
    return %arg0, %c0_i32, %c0_i32_0 : i32, i32, i32
  }
  func.func @transform_3(%arg0: i32) -> (i32, i32, i32) {
    %c0_i32 = arith.constant 0 : i32
    %c0_i32_0 = arith.constant 0 : i32
    %c0_i32_1 = arith.constant 0 : i32
    return %arg0, %c0_i32, %c0_i32_0 : i32, i32, i32
  }
  func.func @transform_4(%arg0: i32) -> (i32, i32) {
    %c0_i32 = arith.constant 0 : i32
    %c0_i32_0 = arith.constant 0 : i32
    %c0_i32_1 = arith.constant 0 : i32
    return %c0_i32, %c0_i32_0 : i32, i32
  }
  func.func @transform_5(%arg0: i32) -> (i32, i32) {
    %c0_i32 = arith.constant 0 : i32
    %c0_i32_0 = arith.constant 0 : i32
    %c0_i32_1 = arith.constant 0 : i32
    return %c0_i32, %c0_i32_0 : i32, i32
  }
  func.func @transform_6(%arg0: i32) -> (i32, i32) {
    %c0_i32 = arith.constant 0 : i32
    %c0_i32_0 = arith.constant 0 : i32
    %c0_i32_1 = arith.constant 0 : i32
    return %c0_i32, %c0_i32_0 : i32, i32
  }
  func.func @transform_7(%arg0: i32) -> (i32, i32) {
    %c0_i32 = arith.constant 0 : i32
    %c0_i32_0 = arith.constant 0 : i32
    %c0_i32_1 = arith.constant 0 : i32
    return %c0_i32, %c0_i32_0 : i32, i32
  }
  func.func @transform_8(%arg0: i32) -> (i32, i32) {
    %c0_i32 = arith.constant 0 : i32
    %c0_i32_0 = arith.constant 0 : i32
    %c0_i32_1 = arith.constant 0 : i32
    return %c0_i32, %c0_i32_0 : i32, i32
  }
  func.func @transform_9(%arg0: i32) -> (i32, i32) {
    %c0_i32 = arith.constant 0 : i32
    %c0_i32_0 = arith.constant 0 : i32
    %c0_i32_1 = arith.constant 0 : i32
    return %c0_i32, %c0_i32_0 : i32, i32
  }
  func.func @transform_10(%arg0: i32) -> (i32, i32, i32) {
    %c0_i32 = arith.constant 0 : i32
    %c0_i32_0 = arith.constant 0 : i32
    %c0_i32_1 = arith.constant 0 : i32
    return %arg0, %c0_i32, %c0_i32_0 : i32, i32, i32
  }
}

</mosaic_0001>

<llo_original>
// kernel: tpu_custom_call.1
$region0: #{tpu_custom_call.1}
  #allocation0 [shape = 'u32[]', space=smem, size = 0x4, offset = 0x4, fixed_abs, tag = 'smem constant byte address 0x4 - core index']
  #allocation1 [shape = 'u32[144,128]{1,0:T(1,128)}', space=vmem, size = 0x12000, scoped, tag = 'internal scratch']
  %s0 = inlined_call_operand.vmem [shape: f32[2,64,32], index: 0, kind: input, shape index: {}]
  %s1 = inlined_call_operand.vmem [shape: f32[2,64,32], index: 1, kind: input, shape index: {}]
  %s2 = inlined_call_operand.vmem [shape: f32[2,64,32], index: 2, kind: input, shape index: {}]
  %s3 = inlined_call_operand.vmem [shape: f32[2,64,32], index: 3, kind: input, shape index: {}]
  %s4 = inlined_call_operand.vmem [shape: f32[32,16], index: 4, kind: input, shape index: {}]
  %s5 = inlined_call_operand.vmem [shape: f32[1,16], index: 5, kind: input, shape index: {}]
  %s6 = inlined_call_operand.vmem [shape: f32[16,16], index: 6, kind: input, shape index: {}]
  %s7 = inlined_call_operand.vmem [shape: f32[1,16], index: 7, kind: input, shape index: {}]
  %s8 = inlined_call_operand.vmem [shape: f32[16,4], index: 8, kind: input, shape index: {}]
  %s9 = inlined_call_operand.vmem [shape: f32[1,4], index: 9, kind: input, shape index: {}]
  %s10 = inlined_call_operand.vmem [shape: f32[2,64,32], index: 10, kind: output, shape index: {}]
  %s11 = sld [smem:[#allocation0]]
  $region73: #{tpu_custom_call.1} parent=0
    _
  %s13 = ssub.s32 1, %s11
  %s14 = scalar_select 0, %s13, %s11
  loop: start=0, step=1, limit=4
  $region2: #{tpu_custom_call.1} parent=0 // loop_pre_header
    _
  $region3: #{tpu_custom_call.1} parent=0 // loop_header
    %s16 = sphi 0, %s20
    %p17 = scmp.ge.s32.totalorder %s16, 4
    %s26 = sphi 0, %s28
    %s29 = sphi 0, %s26
    %s30 = sphi 0, %s29
    %s46 = sphi 0, %s30
    %s52 = sphi 0, %s54
    %s55 = sphi 0, %s52
    %s56 = sphi 0, %s55
    %s72 = sphi 0, %s56
    %s78 = sphi 0, %s80
    %s81 = sphi 0, %s78
    %s82 = sphi 0, %s81
    %s98 = sphi 0, %s82
    %s104 = sphi 0, %s106
    %s107 = sphi 0, %s104
    %s108 = sphi 0, %s107
    %s124 = sphi 0, %s108
    %s128 = sphi 0, %s128
    %s130 = sphi 0, %s128
    %s131 = sphi 0, %s130
    %s145 = sphi 0, %s131
    %s149 = sphi 0, %s149
    %s151 = sphi 0, %s149
    %s152 = sphi 0, %s151
    %s166 = sphi 0, %s152
    %s170 = sphi 0, %s170
    %s172 = sphi 0, %s170
    %s173 = sphi 0, %s172
    %s187 = sphi 0, %s173
    %s191 = sphi 0, %s191
    %s193 = sphi 0, %s191
    %s194 = sphi 0, %s193
    %s208 = sphi 0, %s194
    %s212 = sphi 0, %s212
    %s214 = sphi 0, %s212
    %s215 = sphi 0, %s214
    %s229 = sphi 0, %s215
    %s233 = sphi 0, %s233
    %s235 = sphi 0, %s233
    %s236 = sphi 0, %s235
    %s250 = sphi 0, %s236
    %s256 = sphi 0, %s258
    %s259 = sphi 0, %s256
    %s260 = sphi 0, %s259
    %s276 = sphi 0, %s260
  $region4: #{tpu_custom_call.1} parent=0 // loop_header_branch
    %19 = sbr.rel (%p17) target = $region8
  $region5: #{tpu_custom_call.1} parent=0 // loop_body
    %s21 = ssub.s32 %s16, 1
    %s22 = ssub.s32 %s16, 2
    %s23 = sadd.s32 %s16, 1
    %s24 = ssub.s32 %s16, %s23
    %p25 = scmp.eq.s32.totalorder %s24, 0
    %s27 = sadd.s32 %s26, 1
    %s28 = scalar_select %p25, %s26, %s27
    %p31 = pneg %p25
    %p32 = scmp.eq.s32.totalorder %s16, 1
    %p33 = por %p31, %p32
    %p34 = scmp.ne.s32.totalorder %s26, %s29
    %p35 = scmp.eq.s32.totalorder %s16, 0
    %p36 = por %p34, %p35
    %p37 = scmp.ne.s32.totalorder %s26, %s29
    %p38 = scmp.eq.s32.totalorder %s21, 1
    %p39 = por %p37, %p38
    %p40 = scmp.ne.s32.totalorder %s29, %s30
    %p41 = scmp.eq.s32.totalorder %s21, 0
    %p42 = por %p40, %p41
    %p43 = scmp.ne.s32.totalorder %s29, %s30
    %p44 = scmp.eq.s32.totalorder %s22, 1
    %p45 = por %p43, %p44
    %p47 = scmp.ne.s32.totalorder %s30, %s46
    %p48 = scmp.eq.s32.totalorder %s22, 0
    %p49 = por %p47, %p48
    %s50 = ssub.s32 %s16, %s23
    %p51 = scmp.eq.s32.totalorder %s50, 0
    %s53 = sadd.s32 %s52, 1
    %s54 = scalar_select %p51, %s52, %s53
    %p57 = pneg %p51
    %p58 = scmp.eq.s32.totalorder %s16, 1
    %p59 = por %p57, %p58
    %p60 = scmp.ne.s32.totalorder %s52, %s55
    %p61 = scmp.eq.s32.totalorder %s16, 0
    %p62 = por %p60, %p61
    %p63 = scmp.ne.s32.totalorder %s52, %s55
    %p64 = scmp.eq.s32.totalorder %s21, 1
    %p65 = por %p63, %p64
    %p66 = scmp.ne.s32.totalorder %s55, %s56
    %p67 = scmp.eq.s32.totalorder %s21, 0
    %p68 = por %p66, %p67
    %p69 = scmp.ne.s32.totalorder %s55, %s56
    %p70 = scmp.eq.s32.totalorder %s22, 1
    %p71 = por %p69, %p70
    %p73 = scmp.ne.s32.totalorder %s56, %s72
    %p74 = scmp.eq.s32.totalorder %s22, 0
    %p75 = por %p73, %p74
    %s76 = ssub.s32 %s16, %s23
    %p77 = scmp.eq.s32.totalorder %s76, 0
    %s79 = sadd.s32 %s78, 1
    %s80 = scalar_select %p77, %s78, %s79
    %p83 = pneg %p77
    %p84 = scmp.eq.s32.totalorder %s16, 1
    %p85 = por %p83, %p84
    %p86 = scmp.ne.s32.totalorder %s78, %s81
    %p87 = scmp.eq.s32.totalorder %s16, 0
    %p88 = por %p86, %p87
    %p89 = scmp.ne.s32.totalorder %s78, %s81
    %p90 = scmp.eq.s32.totalorder %s21, 1
    %p91 = por %p89, %p90
    %p92 = scmp.ne.s32.totalorder %s81, %s82
    %p93 = scmp.eq.s32.totalorder %s21, 0
    %p94 = por %p92, %p93
    %p95 = scmp.ne.s32.totalorder %s81, %s82
    %p96 = scmp.eq.s32.totalorder %s22, 1
    %p97 = por %p95, %p96
    %p99 = scmp.ne.s32.totalorder %s82, %s98
    %p100 = scmp.eq.s32.totalorder %s22, 0
    %p101 = por %p99, %p100
    %s102 = ssub.s32 %s16, %s23
    %p103 = scmp.eq.s32.totalorder %s102, 0
    %s105 = sadd.s32 %s104, 1
    %s106 = scalar_select %p103, %s104, %s105
    %p109 = pneg %p103
    %p110 = scmp.eq.s32.totalorder %s16, 1
    %p111 = por %p109, %p110
    %p112 = scmp.ne.s32.totalorder %s104, %s107
    %p113 = scmp.eq.s32.totalorder %s16, 0
    %p114 = por %p112, %p113
    %p115 = scmp.ne.s32.totalorder %s104, %s107
    %p116 = scmp.eq.s32.totalorder %s21, 1
    %p117 = por %p115, %p116
    %p118 = scmp.ne.s32.totalorder %s107, %s108
    %p119 = scmp.eq.s32.totalorder %s21, 0
    %p120 = por %p118, %p119
    %p121 = scmp.ne.s32.totalorder %s107, %s108
    %p122 = scmp.eq.s32.totalorder %s22, 1
    %p123 = por %p121, %p122
    %p125 = scmp.ne.s32.totalorder %s108, %s124
    %p126 = scmp.eq.s32.totalorder %s22, 0
    %p127 = por %p125, %p126
    %s129 = sadd.s32 %s128, 1
    %p132 = scmp.eq.s32.totalorder %s16, 1
    %p133 = scmp.ne.s32.totalorder %s128, %s130
    %p134 = scmp.eq.s32.totalorder %s16, 0
    %p135 = por %p133, %p134
    %p136 = scmp.ne.s32.totalorder %s128, %s130
    %p137 = scmp.eq.s32.totalorder %s21, 1
    %p138 = por %p136, %p137
    %p139 = scmp.ne.s32.totalorder %s130, %s131
    %p140 = scmp.eq.s32.totalorder %s21, 0
    %p141 = por %p139, %p140
    %p142 = scmp.ne.s32.totalorder %s130, %s131
    %p143 = scmp.eq.s32.totalorder %s22, 1
    %p144 = por %p142, %p143
    %p146 = scmp.ne.s32.totalorder %s131, %s145
    %p147 = scmp.eq.s32.totalorder %s22, 0
    %p148 = por %p146, %p147
    %s150 = sadd.s32 %s149, 1
    %p153 = scmp.eq.s32.totalorder %s16, 1
    %p154 = scmp.ne.s32.totalorder %s149, %s151
    %p155 = scmp.eq.s32.totalorder %s16, 0
    %p156 = por %p154, %p155
    %p157 = scmp.ne.s32.totalorder %s149, %s151
    %p158 = scmp.eq.s32.totalorder %s21, 1
    %p159 = por %p157, %p158
    %p160 = scmp.ne.s32.totalorder %s151, %s152
    %p161 = scmp.eq.s32.totalorder %s21, 0
    %p162 = por %p160, %p161
    %p163 = scmp.ne.s32.totalorder %s151, %s152
    %p164 = scmp.eq.s32.totalorder %s22, 1
    %p165 = por %p163, %p164
    %p167 = scmp.ne.s32.totalorder %s152, %s166
    %p168 = scmp.eq.s32.totalorder %s22, 0
    %p169 = por %p167, %p168
    %s171 = sadd.s32 %s170, 1
    %p174 = scmp.eq.s32.totalorder %s16, 1
    %p175 = scmp.ne.s32.totalorder %s170, %s172
    %p176 = scmp.eq.s32.totalorder %s16, 0
    %p177 = por %p175, %p176
    %p178 = scmp.ne.s32.totalorder %s170, %s172
    %p179 = scmp.eq.s32.totalorder %s21, 1
    %p180 = por %p178, %p179
    %p181 = scmp.ne.s32.totalorder %s172, %s173
    %p182 = scmp.eq.s32.totalorder %s21, 0
    %p183 = por %p181, %p182
    %p184 = scmp.ne.s32.totalorder %s172, %s173
    %p185 = scmp.eq.s32.totalorder %s22, 1
    %p186 = por %p184, %p185
    %p188 = scmp.ne.s32.totalorder %s173, %s187
    %p189 = scmp.eq.s32.totalorder %s22, 0
    %p190 = por %p188, %p189
    %s192 = sadd.s32 %s191, 1
    %p195 = scmp.eq.s32.totalorder %s16, 1
    %p196 = scmp.ne.s32.totalorder %s191, %s193
    %p197 = scmp.eq.s32.totalorder %s16, 0
    %p198 = por %p196, %p197
    %p199 = scmp.ne.s32.totalorder %s191, %s193
    %p200 = scmp.eq.s32.totalorder %s21, 1
    %p201 = por %p199, %p200
    %p202 = scmp.ne.s32.totalorder %s193, %s194
    %p203 = scmp.eq.s32.totalorder %s21, 0
    %p204 = por %p202, %p203
    %p205 = scmp.ne.s32.totalorder %s193, %s194
    %p206 = scmp.eq.s32.totalorder %s22, 1
    %p207 = por %p205, %p206
    %p209 = scmp.ne.s32.totalorder %s194, %s208
    %p210 = scmp.eq.s32.totalorder %s22, 0
    %p211 = por %p209, %p210
    %s213 = sadd.s32 %s212, 1
    %p216 = scmp.eq.s32.totalorder %s16, 1
    %p217 = scmp.ne.s32.totalorder %s212, %s214
    %p218 = scmp.eq.s32.totalorder %s16, 0
    %p219 = por %p217, %p218
    %p220 = scmp.ne.s32.totalorder %s212, %s214
    %p221 = scmp.eq.s32.totalorder %s21, 1
    %p222 = por %p220, %p221
    %p223 = scmp.ne.s32.totalorder %s214, %s215
    %p224 = scmp.eq.s32.totalorder %s21, 0
    %p225 = por %p223, %p224
    %p226 = scmp.ne.s32.totalorder %s214, %s215
    %p227 = scmp.eq.s32.totalorder %s22, 1
    %p228 = por %p226, %p227
    %p230 = scmp.ne.s32.totalorder %s215, %s229
    %p231 = scmp.eq.s32.totalorder %s22, 0
    %p232 = por %p230, %p231
    %s234 = sadd.s32 %s233, 1
    %p237 = scmp.eq.s32.totalorder %s16, 1
    %p238 = scmp.ne.s32.totalorder %s233, %s235
    %p239 = scmp.eq.s32.totalorder %s16, 0
    %p240 = por %p238, %p239
    %p241 = scmp.ne.s32.totalorder %s233, %s235
    %p242 = scmp.eq.s32.totalorder %s21, 1
    %p243 = por %p241, %p242
    %p244 = scmp.ne.s32.totalorder %s235, %s236
    %p245 = scmp.eq.s32.totalorder %s21, 0
    %p246 = por %p244, %p245
    %p247 = scmp.ne.s32.totalorder %s235, %s236
    %p248 = scmp.eq.s32.totalorder %s22, 1
    %p249 = por %p247, %p248
    %p251 = scmp.ne.s32.totalorder %s236, %s250
    %p252 = scmp.eq.s32.totalorder %s22, 0
    %p253 = por %p251, %p252
    %s254 = ssub.s32 %s16, %s23
    %p255 = scmp.eq.s32.totalorder %s254, 0
    %s257 = sadd.s32 %s256, 1
    %s258 = scalar_select %p255, %s256, %s257
    %p261 = pneg %p255
    %p262 = scmp.eq.s32.totalorder %s16, 1
    %p263 = por %p261, %p262
    %p264 = scmp.ne.s32.totalorder %s256, %s259
    %p265 = scmp.eq.s32.totalorder %s16, 0
    %p266 = por %p264, %p265
    %p267 = scmp.ne.s32.totalorder %s256, %s259
    %p268 = scmp.eq.s32.totalorder %s21, 1
    %p269 = por %p267, %p268
    %p270 = scmp.ne.s32.totalorder %s259, %s260
    %p271 = scmp.eq.s32.totalorder %s21, 0
    %p272 = por %p270, %p271
    %p273 = scmp.ne.s32.totalorder %s259, %s260
    %p274 = scmp.eq.s32.totalorder %s22, 1
    %p275 = por %p273, %p274
    %p277 = scmp.ne.s32.totalorder %s260, %s276
    %p278 = scmp.eq.s32.totalorder %s22, 0
    %p279 = por %p277, %p278
    %p280 = scmp.le.s32.totalorder 1, %s16
    %p281 = scmp.lt.s32.totalorder %s16, 3
    %p282 = pnand %p280, %p281
    %p283 = pneg %p282
    // Predicated region
    $region9: #{tpu_custom_call.1} parent=5 // pred_check
      _
    $region10: #{tpu_custom_call.1} parent=5 // pred_check_branch
      %285 = sbr.rel (%p282) target = $region12
    $region11: #{tpu_custom_call.1} parent=5 // pred_region
      %s286 = ssub.s32 %s16, 1
      // Predicated region
      $region13: #{tpu_custom_call.1} parent=11 // pred_check
        %p287 = pneg %p141
      $region14: #{tpu_custom_call.1} parent=11 // pred_check_branch
        %289 = sbr.rel (%p287) target = $region16
      $region15: #{tpu_custom_call.1} parent=11 // pred_region
        _
      $region16: #{tpu_custom_call.1} parent=11 // pred_fallthru
        _
      // Predicated region
      $region17: #{tpu_custom_call.1} parent=11 // pred_check
        %p290 = pneg %p162
      $region18: #{tpu_custom_call.1} parent=11 // pred_check_branch
        %292 = sbr.rel (%p290) target = $region20
      $region19: #{tpu_custom_call.1} parent=11 // pred_region
        _
      $region20: #{tpu_custom_call.1} parent=11 // pred_fallthru
        _
      // Predicated region
      $region21: #{tpu_custom_call.1} parent=11 // pred_check
        %p293 = pneg %p183
      $region22: #{tpu_custom_call.1} parent=11 // pred_check_branch
        %295 = sbr.rel (%p293) target = $region24
      $region23: #{tpu_custom_call.1} parent=11 // pred_region
        _
      $region24: #{tpu_custom_call.1} parent=11 // pred_fallthru
        _
      // Predicated region
      $region25: #{tpu_custom_call.1} parent=11 // pred_check
        %p296 = pneg %p204
      $region26: #{tpu_custom_call.1} parent=11 // pred_check_branch
        %298 = sbr.rel (%p296) target = $region28
      $region27: #{tpu_custom_call.1} parent=11 // pred_region
        _
      $region28: #{tpu_custom_call.1} parent=11 // pred_fallthru
        _
      // Predicated region
      $region29: #{tpu_custom_call.1} parent=11 // pred_check
        %p299 = pneg %p225
      $region30: #{tpu_custom_call.1} parent=11 // pred_check_branch
        %301 = sbr.rel (%p299) target = $region32
      $region31: #{tpu_custom_call.1} parent=11 // pred_region
        _
      $region32: #{tpu_custom_call.1} parent=11 // pred_fallthru
        _
      // Predicated region
      $region33: #{tpu_custom_call.1} parent=11 // pred_check
        %p302 = pneg %p246
      $region34: #{tpu_custom_call.1} parent=11 // pred_check_branch
        %304 = sbr.rel (%p302) target = $region36
      $region35: #{tpu_custom_call.1} parent=11 // pred_region
        _
      $region36: #{tpu_custom_call.1} parent=11 // pred_fallthru
        _
    $region12: #{tpu_custom_call.1} parent=5 // pred_fallthru
      _
    %p305 = scmp.lt.s32.totalorder %s16, 2
    // Predicated region
    $region37: #{tpu_custom_call.1} parent=5 // pred_check
      %p306 = pneg %p305
    $region38: #{tpu_custom_call.1} parent=5 // pred_check_branch
      %308 = sbr.rel (%p306) target = $region40
    $region39: #{tpu_custom_call.1} parent=5 // pred_region
      // Predicated region
      $region41: #{tpu_custom_call.1} parent=39 // pred_check
        %p309 = pneg %p36
      $region42: #{tpu_custom_call.1} parent=39 // pred_check_branch
        %311 = sbr.rel (%p309) target = $region44
      $region43: #{tpu_custom_call.1} parent=39 // pred_region
        %p312 = scmp.lt.s32.totalorder %s16, 1
        %s313 = scalar_select %p312, %s16, 1
        %s314 = smul.addr %s313, 8
        %s315 = smul.addr %s314, 8
        %s316 = scalar_lea.vmem %s0, %s315
      $region44: #{tpu_custom_call.1} parent=39 // pred_fallthru
        _
      // Predicated region
      $region45: #{tpu_custom_call.1} parent=39 // pred_check
        %p317 = pneg %p62
      $region46: #{tpu_custom_call.1} parent=39 // pred_check_branch
        %319 = sbr.rel (%p317) target = $region48
      $region47: #{tpu_custom_call.1} parent=39 // pred_region
        %p320 = scmp.lt.s32.totalorder %s16, 1
        %s321 = scalar_select %p320, %s16, 1
        %s322 = smul.addr %s321, 8
        %s323 = smul.addr %s322, 8
        %s324 = scalar_lea.vmem %s1, %s323
      $region48: #{tpu_custom_call.1} parent=39 // pred_fallthru
        _
      // Predicated region
      $region49: #{tpu_custom_call.1} parent=39 // pred_check
        %p325 = pneg %p88
      $region50: #{tpu_custom_call.1} parent=39 // pred_check_branch
        %327 = sbr.rel (%p325) target = $region52
      $region51: #{tpu_custom_call.1} parent=39 // pred_region
        %p328 = scmp.lt.s32.totalorder %s16, 1
        %s329 = scalar_select %p328, %s16, 1
        %s330 = smul.addr %s329, 8
        %s331 = smul.addr %s330, 8
        %s332 = scalar_lea.vmem %s2, %s331
      $region52: #{tpu_custom_call.1} parent=39 // pred_fallthru
        _
      // Predicated region
      $region53: #{tpu_custom_call.1} parent=39 // pred_check
        %p333 = pneg %p114
      $region54: #{tpu_custom_call.1} parent=39 // pred_check_branch
        %335 = sbr.rel (%p333) target = $region56
      $region55: #{tpu_custom_call.1} parent=39 // pred_region
        %p336 = scmp.lt.s32.totalorder %s16, 1
        %s337 = scalar_select %p336, %s16, 1
        %s338 = smul.addr %s337, 8
        %s339 = smul.addr %s338, 8
        %s340 = scalar_lea.vmem %s3, %s339
      $region56: #{tpu_custom_call.1} parent=39 // pred_fallthru
        _
    $region40: #{tpu_custom_call.1} parent=5 // pred_fallthru
      _
    %p341 = scmp.le.s32.totalorder 1, %s16
    %p342 = scmp.lt.s32.totalorder %s16, 3
    %p343 = pnand %p341, %p342
    %p344 = pneg %p343
    // Predicated region
    $region57: #{tpu_custom_call.1} parent=5 // pred_check
      _
    $region58: #{tpu_custom_call.1} parent=5 // pred_check_branch
      %346 = sbr.rel (%p343) target = $region60
    $region59: #{tpu_custom_call.1} parent=5 // pred_region
      %s347 = ssub.s32 %s16, 1
      %p348 = scmp.lt.s32.totalorder %s21, 1
      %s349 = scalar_select %p348, %s21, 1
      %s350 = smul.addr %s349, 8
      %s351 = smul.addr %s350, 8
      %s352 = scalar_lea.vmem %s0, %s351
      %p353 = pneg %p42
      %p354 = pneg %p39
      %p355 = scmp.lt.s32.totalorder %s21, 1
      %s356 = scalar_select %p355, %s21, 1
      %s357 = smul.addr %s356, 8
      %s358 = smul.addr %s357, 8
      %s359 = scalar_lea.vmem %s1, %s358
      %p360 = pneg %p68
      %p361 = pneg %p65
      %p362 = scmp.lt.s32.totalorder %s21, 1
      %s363 = scalar_select %p362, %s21, 1
      %s364 = smul.addr %s363, 8
      %s365 = smul.addr %s364, 8
      %s366 = scalar_lea.vmem %s2, %s365
      %p367 = pneg %p94
      %p368 = pneg %p91
      %p369 = scmp.lt.s32.totalorder %s21, 1
      %s370 = scalar_select %p369, %s21, 1
      %s371 = smul.addr %s370, 8
      %s372 = smul.addr %s371, 8
      %s373 = scalar_lea.vmem %s3, %s372
      %p374 = pneg %p120
      %p375 = pneg %p117
      %p376 = pneg %p141
      %p377 = pneg %p138
      %p378 = pneg %p162
      %p379 = pneg %p159
      %p380 = pneg %p183
      %p381 = pneg %p180
      %p382 = pneg %p204
      %p383 = pneg %p201
      %p384 = pneg %p225
      %p385 = pneg %p222
      %p386 = pneg %p246
      %p387 = pneg %p243
      %p388 = pneg %p272
      %p389 = pneg %p269
      %p390 = scmp.lt.s32.totalorder %s21, 1
      %s391 = scalar_select %p390, %s21, 1
      %s392 = smul.addr %s391, 8
      %s393 = smul.addr %s392, 8
      %s394 = scalar_lea.vmem %s10, %s393
      %p395 = scmp.lt.s32.totalorder %s21, 1
      %s396 = scalar_select %p395, %s21, 1
      %s397 = smul.addr %s396, 8
      %s398 = smul.addr %s397, 8
      %s399 = scalar_lea.vmem %s0, %s398
      %p400 = scmp.lt.s32.totalorder %s21, 1
      %s401 = scalar_select %p400, %s21, 1
      %s402 = smul.addr %s401, 8
      %s403 = smul.addr %s402, 8
      %s404 = scalar_lea.vmem %s1, %s403
      %p405 = scmp.lt.s32.totalorder %s21, 1
      %s406 = scalar_select %p405, %s21, 1
      %s407 = smul.addr %s406, 8
      %s408 = smul.addr %s407, 8
      %s409 = scalar_lea.vmem %s2, %s408
      %p410 = scmp.lt.s32.totalorder %s21, 1
      %s411 = scalar_select %p410, %s21, 1
      %s412 = smul.addr %s411, 8
      %s413 = smul.addr %s412, 8
      %s414 = scalar_lea.vmem %s3, %s413
      %p415 = scmp.lt.s32.totalorder %s21, 1
      %s416 = scalar_select %p415, %s21, 1
      %s417 = smul.addr %s416, 8
      %s418 = smul.addr %s417, 8
      %s419 = scalar_lea.vmem %s10, %s418
      %v420 = vld [vmem:[%s399] sm:$0xff]
      %v421 = vld [vmem:[%s399 + $0x8] sm:$0xff]
      %v422 = vld [vmem:[%s399 + $0x10] sm:$0xff]
      %v423 = vld [vmem:[%s399 + $0x18] sm:$0xff]
      %v424 = vld [vmem:[%s399 + $0x20] sm:$0xff]
      %v425 = vld [vmem:[%s399 + $0x28] sm:$0xff]
      %v426 = vld [vmem:[%s399 + $0x30] sm:$0xff]
      %v427 = vld [vmem:[%s399 + $0x38] sm:$0xff]
      %v428 = vld [vmem:[%s404] sm:$0xff]
      %v429 = vld [vmem:[%s404 + $0x8] sm:$0xff]
      %v430 = vld [vmem:[%s404 + $0x10] sm:$0xff]
      %v431 = vld [vmem:[%s404 + $0x18] sm:$0xff]
      %v432 = vld [vmem:[%s404 + $0x20] sm:$0xff]
      %v433 = vld [vmem:[%s404 + $0x28] sm:$0xff]
      %v434 = vld [vmem:[%s404 + $0x30] sm:$0xff]
      %v435 = vld [vmem:[%s404 + $0x38] sm:$0xff]
      %v436 = vadd.f32 %v420, %v428
      %v437 = vadd.f32 %v421, %v429
      %v438 = vadd.f32 %v422, %v430
      %v439 = vadd.f32 %v423, %v431
      %v440 = vadd.f32 %v424, %v432
      %v441 = vadd.f32 %v425, %v433
      %v442 = vadd.f32 %v426, %v434
      %v443 = vadd.f32 %v427, %v435
      %v444 = vld [vmem:[%s409] sm:$0xff]
      %v445 = vld [vmem:[%s409 + $0x8] sm:$0xff]
      %v446 = vld [vmem:[%s409 + $0x10] sm:$0xff]
      %v447 = vld [vmem:[%s409 + $0x18] sm:$0xff]
      %v448 = vld [vmem:[%s409 + $0x20] sm:$0xff]
      %v449 = vld [vmem:[%s409 + $0x28] sm:$0xff]
      %v450 = vld [vmem:[%s409 + $0x30] sm:$0xff]
      %v451 = vld [vmem:[%s409 + $0x38] sm:$0xff]
      %v452 = vadd.f32 %v436, %v444
      %v453 = vadd.f32 %v437, %v445
      %v454 = vadd.f32 %v438, %v446
      %v455 = vadd.f32 %v439, %v447
      %v456 = vadd.f32 %v440, %v448
      %v457 = vadd.f32 %v441, %v449
      %v458 = vadd.f32 %v442, %v450
      %v459 = vadd.f32 %v443, %v451
      %v460 = vld [vmem:[%s414] sm:$0xff]
      %v461 = vld [vmem:[%s414 + $0x8] sm:$0xff]
      %v462 = vld [vmem:[%s414 + $0x10] sm:$0xff]
      %v463 = vld [vmem:[%s414 + $0x18] sm:$0xff]
      %v464 = vld [vmem:[%s414 + $0x20] sm:$0xff]
      %v465 = vld [vmem:[%s414 + $0x28] sm:$0xff]
      %v466 = vld [vmem:[%s414 + $0x30] sm:$0xff]
      %v467 = vld [vmem:[%s414 + $0x38] sm:$0xff]
      %v468 = vadd.f32 %v452, %v460
      %v469 = vadd.f32 %v453, %v461
      %v470 = vadd.f32 %v454, %v462
      %v471 = vadd.f32 %v455, %v463
      %v472 = vadd.f32 %v456, %v464
      %v473 = vadd.f32 %v457, %v465
      %v474 = vadd.f32 %v458, %v466
      %v475 = vadd.f32 %v459, %v467
      %vm476 = vcmask 523264
      %v478 = vsel %vm476, 0.015625, 0
      %480 = vmatprep.subr.mxu0 0.0
      %481 = vmatpush1.msra.mxu0 %v468
      %482 = vmatprep.subr.mxu0 0.0
      %483 = vmatpush1.msra.mxu0 %v469
      %484 = vmatprep.subr.mxu0 0.0
      %485 = vmatpush1.msra.mxu0 %v470
      %486 = vmatprep.subr.mxu0 0.0
      %487 = vmatpush1.msra.mxu0 %v471
      %488 = vmatprep.subr.mxu0 0.0
      %489 = vmatpush1.msra.mxu0 %v472
      %490 = vmatprep.subr.mxu0 0.0
      %491 = vmatpush1.msra.mxu0 %v473
      %492 = vmatprep.subr.mxu0 0.0
      %493 = vmatpush1.msra.mxu0 %v474
      %494 = vmatprep.subr.mxu0 0.0
      %495 = vmatpush1.msra.mxu0 %v475
      %496 = vmatprep.subr.mxu0 0.0
      %497 = vmatpush1.msra.mxu0 0.0
      %498 = vmatprep.subr.mxu0 0.0
      %499 = vmatpush1.msra.mxu0 0.0
      %500 = vmatprep.subr.mxu0 0.0
      %501 = vmatpush1.msra.mxu0 0.0
      %502 = vmatprep.subr.mxu0 0.0
      %503 = vmatpush1.msra.mxu0 0.0
      %504 = vmatprep.subr.mxu0 0.0
      %505 = vmatpush1.msra.mxu0 0.0
      %506 = vmatprep.subr.mxu0 0.0
      %507 = vmatpush1.msra.mxu0 0.0
      %508 = vmatprep.subr.mxu0 0.0
      %509 = vmatpush1.msra.mxu0 0.0
      %510 = vmatprep.subr.mxu0 0.0
      %511 = vmatpush1.msra.mxu0 0.0
      %512 = vmatprep.subr.mxu0 0.0
      %513 = vmatpush1.msra.mxu0 0.0
      %514 = vmatprep.subr.mxu0 0.0
      %515 = vmatpush1.msra.mxu0 0.0
      %516 = vmatprep.subr.mxu0 0.0
      %517 = vmatpush1.msra.mxu0 0.0
      %518 = vmatprep.subr.mxu0 0.0
      %519 = vmatpush1.msra.mxu0 0.0
      %520 = vmatprep.subr.mxu0 0.0
      %521 = vmatpush1.msra.mxu0 0.0
      %522 = vmatprep.subr.mxu0 0.0
      %523 = vmatpush1.msra.mxu0 0.0
      %524 = vmatprep.subr.mxu0 0.0
      %525 = vmatpush1.msra.mxu0 0.0
      %526 = vmatprep.subr.mxu0 0.0
      %527 = vmatpush1.msra.mxu0 0.0
      %528 = vmatprep.subr.mxu0 0.0
      %529 = vmatpush1.msra.mxu0 0.0
      %530 = vmatprep.subr.mxu0 0.0
      %531 = vmatpush1.msra.mxu0 0.0
      %532 = vmatprep.subr.mxu0 0.0
      %533 = vmatpush1.msra.mxu0 0.0
      %534 = vmatprep.subr.mxu0 0.0
      %535 = vmatpush1.msra.mxu0 0.0
      %536 = vmatprep.subr.mxu0 0.0
      %537 = vmatpush1.msra.mxu0 0.0
      %538 = vmatprep.subr.mxu0 0.0
      %539 = vmatpush1.msra.mxu0 0.0
      %540 = vmatprep.subr.mxu0 0.0
      %541 = vmatpush1.msra.mxu0 0.0
      %542 = vmatprep.subr.mxu0 0.0
      %543 = vmatpush1.msra.mxu0 0.0
      %544 = vmatprep.mubr.f32.mxu0 0.0
      %545 = vmatmul.mubr.f32.gmra.mrb[0].mxu0 %v478
      %v546 = vpop.f32.mrb[0].mxu0
      %v547 = vadd.f32 0.0, %v546
      %v548 = vpop.f32.mrb[0].mxu0
      %549 = vdwg.mxu0
      %v550 = vld [vmem:[%s4] sm:$0xff]
      %v551 = vld [vmem:[%s4 + $0x8] sm:$0xff]
      %v552 = vld [vmem:[%s4 + $0x10] sm:$0xff]
      %v553 = vld [vmem:[%s4 + $0x18] sm:$0xff]
      %v554 = vld [vmem:[%s5] sm:$0x1]
      %vm555 = vcmask 261120
      %v557 = vsel %vm555, %v547, 0
      %559 = vmatprep.subr.mxu0 0.0
      %560 = vmatpush1.msra.mxu0 %v550
      %561 = vmatprep.subr.mxu0 0.0
      %562 = vmatpush1.msra.mxu0 %v551
      %563 = vmatprep.subr.mxu0 0.0
      %564 = vmatpush1.msra.mxu0 %v552
      %565 = vmatprep.subr.mxu0 0.0
      %566 = vmatpush1.msra.mxu0 %v553
      %567 = vmatprep.subr.mxu0 0.0
      %568 = vmatpush1.msra.mxu0 0.0
      %569 = vmatprep.subr.mxu0 0.0
      %570 = vmatpush1.msra.mxu0 0.0
      %571 = vmatprep.subr.mxu0 0.0
      %572 = vmatpush1.msra.mxu0 0.0
      %573 = vmatprep.subr.mxu0 0.0
      %574 = vmatpush1.msra.mxu0 0.0
      %575 = vmatprep.subr.mxu0 0.0
      %576 = vmatpush1.msra.mxu0 0.0
      %577 = vmatprep.subr.mxu0 0.0
      %578 = vmatpush1.msra.mxu0 0.0
      %579 = vmatprep.subr.mxu0 0.0
      %580 = vmatpush1.msra.mxu0 0.0
      %581 = vmatprep.subr.mxu0 0.0
      %582 = vmatpush1.msra.mxu0 0.0
      %583 = vmatprep.subr.mxu0 0.0
      %584 = vmatpush1.msra.mxu0 0.0
      %585 = vmatprep.subr.mxu0 0.0
      %586 = vmatpush1.msra.mxu0 0.0
      %587 = vmatprep.subr.mxu0 0.0
      %588 = vmatpush1.msra.mxu0 0.0
      %589 = vmatprep.subr.mxu0 0.0
      %590 = vmatpush1.msra.mxu0 0.0
      %591 = vmatprep.subr.mxu0 0.0
      %592 = vmatpush1.msra.mxu0 0.0
      %593 = vmatprep.subr.mxu0 0.0
      %594 = vmatpush1.msra.mxu0 0.0
      %595 = vmatprep.subr.mxu0 0.0
      %596 = vmatpush1.msra.mxu0 0.0
      %597 = vmatprep.subr.mxu0 0.0
      %598 = vmatpush1.msra.mxu0 0.0
      %599 = vmatprep.subr.mxu0 0.0
      %600 = vmatpush1.msra.mxu0 0.0
      %601 = vmatprep.subr.mxu0 0.0
      %602 = vmatpush1.msra.mxu0 0.0
      %603 = vmatprep.subr.mxu0 0.0
      %604 = vmatpush1.msra.mxu0 0.0
      %605 = vmatprep.subr.mxu0 0.0
      %606 = vmatpush1.msra.mxu0 0.0
      %607 = vmatprep.subr.mxu0 0.0
      %608 = vmatpush1.msra.mxu0 0.0
      %609 = vmatprep.subr.mxu0 0.0
      %610 = vmatpush1.msra.mxu0 0.0
      %611 = vmatprep.subr.mxu0 0.0
      %612 = vmatpush1.msra.mxu0 0.0
      %613 = vmatprep.subr.mxu0 0.0
      %614 = vmatpush1.msra.mxu0 0.0
      %615 = vmatprep.subr.mxu0 0.0
      %616 = vmatpush1.msra.mxu0 0.0
      %617 = vmatprep.subr.mxu0 0.0
      %618 = vmatpush1.msra.mxu0 0.0
      %619 = vmatprep.subr.mxu0 0.0
      %620 = vmatpush1.msra.mxu0 0.0
      %621 = vmatprep.subr.mxu0 0.0
      %622 = vmatpush1.msra.mxu0 0.0
      %623 = vmatprep.mubr.f32.mxu0 0.0
      %624 = vmatmul.mubr.f32.gmra.mrb[0].mxu0 %v557
      %v625 = vpop.f32.mrb[0].mxu0
      %v626 = vadd.f32 %v554, %v625
      %v627 = vpop.f32.mrb[0].mxu0
      %628 = vdwg.mxu0
      %v629 = vxor.u32 %v626, 2147483648
      %v630 = vmul.f32 %v629, 1.442695
      %v631 = vpow.pop %v630
      %v632 = vadd.f32 %v631, 1.0
      %v633 = vrcp.pop %v632
      %v634 = vmul.f32 1.0, %v633
      %v635 = vld [vmem:[%s6] sm:$0xff]
      %v636 = vld [vmem:[%s6 + $0x8] sm:$0xff]
      %v637 = vld [vmem:[%s7] sm:$0x1]
      %vm638 = vcmask 130048
      %v640 = vsel %vm638, %v634, 0
      %642 = vmatprep.subr.mxu0 0.0
      %643 = vmatpush1.msra.mxu0 %v635
      %644 = vmatprep.subr.mxu0 0.0
      %645 = vmatpush1.msra.mxu0 %v636
      %646 = vmatprep.subr.mxu0 0.0
      %647 = vmatpush1.msra.mxu0 0.0
      %648 = vmatprep.subr.mxu0 0.0
      %649 = vmatpush1.msra.mxu0 0.0
      %650 = vmatprep.subr.mxu0 0.0
      %651 = vmatpush1.msra.mxu0 0.0
      %652 = vmatprep.subr.mxu0 0.0
      %653 = vmatpush1.msra.mxu0 0.0
      %654 = vmatprep.subr.mxu0 0.0
      %655 = vmatpush1.msra.mxu0 0.0
      %656 = vmatprep.subr.mxu0 0.0
      %657 = vmatpush1.msra.mxu0 0.0
      %658 = vmatprep.subr.mxu0 0.0
      %659 = vmatpush1.msra.mxu0 0.0
      %660 = vmatprep.subr.mxu0 0.0
      %661 = vmatpush1.msra.mxu0 0.0
      %662 = vmatprep.subr.mxu0 0.0
      %663 = vmatpush1.msra.mxu0 0.0
      %664 = vmatprep.subr.mxu0 0.0
      %665 = vmatpush1.msra.mxu0 0.0
      %666 = vmatprep.subr.mxu0 0.0
      %667 = vmatpush1.msra.mxu0 0.0
      %668 = vmatprep.subr.mxu0 0.0
      %669 = vmatpush1.msra.mxu0 0.0
      %670 = vmatprep.subr.mxu0 0.0
      %671 = vmatpush1.msra.mxu0 0.0
      %672 = vmatprep.subr.mxu0 0.0
      %673 = vmatpush1.msra.mxu0 0.0
      %674 = vmatprep.subr.mxu0 0.0
      %675 = vmatpush1.msra.mxu0 0.0
      %676 = vmatprep.subr.mxu0 0.0
      %677 = vmatpush1.msra.mxu0 0.0
      %678 = vmatprep.subr.mxu0 0.0
      %679 = vmatpush1.msra.mxu0 0.0
      %680 = vmatprep.subr.mxu0 0.0
      %681 = vmatpush1.msra.mxu0 0.0
      %682 = vmatprep.subr.mxu0 0.0
      %683 = vmatpush1.msra.mxu0 0.0
      %684 = vmatprep.subr.mxu0 0.0
      %685 = vmatpush1.msra.mxu0 0.0
      %686 = vmatprep.subr.mxu0 0.0
      %687 = vmatpush1.msra.mxu0 0.0
      %688 = vmatprep.subr.mxu0 0.0
      %689 = vmatpush1.msra.mxu0 0.0
      %690 = vmatprep.subr.mxu0 0.0
      %691 = vmatpush1.msra.mxu0 0.0
      %692 = vmatprep.subr.mxu0 0.0
      %693 = vmatpush1.msra.mxu0 0.0
      %694 = vmatprep.subr.mxu0 0.0
      %695 = vmatpush1.msra.mxu0 0.0
      %696 = vmatprep.subr.mxu0 0.0
      %697 = vmatpush1.msra.mxu0 0.0
      %698 = vmatprep.subr.mxu0 0.0
      %699 = vmatpush1.msra.mxu0 0.0
      %700 = vmatprep.subr.mxu0 0.0
      %701 = vmatpush1.msra.mxu0 0.0
      %702 = vmatprep.subr.mxu0 0.0
      %703 = vmatpush1.msra.mxu0 0.0
      %704 = vmatprep.subr.mxu0 0.0
      %705 = vmatpush1.msra.mxu0 0.0
      %706 = vmatprep.mubr.f32.mxu0 0.0
      %707 = vmatmul.mubr.f32.gmra.mrb[0].mxu0 %v640
      %v708 = vpop.f32.mrb[0].mxu0
      %v709 = vadd.f32 %v637, %v708
      %v710 = vpop.f32.mrb[0].mxu0
      %711 = vdwg.mxu0
      %v712 = vmax.f32 %v709, 0.0
      %v713 = vld [vmem:[%s8] sm:$0xff]
      %v714 = vld [vmem:[%s8 + $0x8] sm:$0xff]
      %v715 = vld [vmem:[%s9] sm:$0x1]
      %v717 = vsel %vm638, %v712, 0
      %719 = vmatprep.subr.mxu0 0.0
      %720 = vmatpush1.msra.mxu0 %v713
      %721 = vmatprep.subr.mxu0 0.0
      %722 = vmatpush1.msra.mxu0 %v714
      %723 = vmatprep.subr.mxu0 0.0
      %724 = vmatpush1.msra.mxu0 0.0
      %725 = vmatprep.subr.mxu0 0.0
      %726 = vmatpush1.msra.mxu0 0.0
      %727 = vmatprep.subr.mxu0 0.0
      %728 = vmatpush1.msra.mxu0 0.0
      %729 = vmatprep.subr.mxu0 0.0
      %730 = vmatpush1.msra.mxu0 0.0
      %731 = vmatprep.subr.mxu0 0.0
      %732 = vmatpush1.msra.mxu0 0.0
      %733 = vmatprep.subr.mxu0 0.0
      %734 = vmatpush1.msra.mxu0 0.0
      %735 = vmatprep.subr.mxu0 0.0
      %736 = vmatpush1.msra.mxu0 0.0
      %737 = vmatprep.subr.mxu0 0.0
      %738 = vmatpush1.msra.mxu0 0.0
      %739 = vmatprep.subr.mxu0 0.0
      %740 = vmatpush1.msra.mxu0 0.0
      %741 = vmatprep.subr.mxu0 0.0
      %742 = vmatpush1.msra.mxu0 0.0
      %743 = vmatprep.subr.mxu0 0.0
      %744 = vmatpush1.msra.mxu0 0.0
      %745 = vmatprep.subr.mxu0 0.0
      %746 = vmatpush1.msra.mxu0 0.0
      %747 = vmatprep.subr.mxu0 0.0
      %748 = vmatpush1.msra.mxu0 0.0
      %749 = vmatprep.subr.mxu0 0.0
      %750 = vmatpush1.msra.mxu0 0.0
      %751 = vmatprep.subr.mxu0 0.0
      %752 = vmatpush1.msra.mxu0 0.0
      %753 = vmatprep.subr.mxu0 0.0
      %754 = vmatpush1.msra.mxu0 0.0
      %755 = vmatprep.subr.mxu0 0.0
      %756 = vmatpush1.msra.mxu0 0.0
      %757 = vmatprep.subr.mxu0 0.0
      %758 = vmatpush1.msra.mxu0 0.0
      %759 = vmatprep.subr.mxu0 0.0
      %760 = vmatpush1.msra.mxu0 0.0
      %761 = vmatprep.subr.mxu0 0.0
      %762 = vmatpush1.msra.mxu0 0.0
      %763 = vmatprep.subr.mxu0 0.0
      %764 = vmatpush1.msra.mxu0 0.0
      %765 = vmatprep.subr.mxu0 0.0
      %766 = vmatpush1.msra.mxu0 0.0
      %767 = vmatprep.subr.mxu0 0.0
      %768 = vmatpush1.msra.mxu0 0.0
      %769 = vmatprep.subr.mxu0 0.0
      %770 = vmatpush1.msra.mxu0 0.0
      %771 = vmatprep.subr.mxu0 0.0
      %772 = vmatpush1.msra.mxu0 0.0
      %773 = vmatprep.subr.mxu0 0.0
      %774 = vmatpush1.msra.mxu0 0.0
      %775 = vmatprep.subr.mxu0 0.0
      %776 = vmatpush1.msra.mxu0 0.0
      %777 = vmatprep.subr.mxu0 0.0
      %778 = vmatpush1.msra.mxu0 0.0
      %779 = vmatprep.subr.mxu0 0.0
      %780 = vmatpush1.msra.mxu0 0.0
      %781 = vmatprep.subr.mxu0 0.0
      %782 = vmatpush1.msra.mxu0 0.0
      %783 = vmatprep.mubr.f32.mxu0 0.0
      %784 = vmatmul.mubr.f32.gmra.mrb[0].mxu0 %v717
      %v785 = vpop.f32.mrb[0].mxu0
      %v786 = vadd.f32 %v715, %v785
      %v787 = vpop.f32.mrb[0].mxu0
      %788 = vdwg.mxu0
      %vm789 = vcmask 24576
      %v790 = vsel %vm789, %v786, -inf
      %791 = vmax.xlane.f32.xlu0 %v790
      %v792 = vpop.xlane.xlu0 %791
      %v793 = vsub.f32 %v786, %v792
      %v794 = vmul.f32 %v793, 1.442695
      %v795 = vpow.pop %v794
      %v796 = vsel %vm789, %v795, 0.0
      %797 = vadd.xlane.f32.xlu0 %v796
      %v798 = vpop.xlane.xlu0 %797
      %v799 = vrcp.pop %v798
      %v800 = vmul.f32 %v795, %v799
      %s801 = vtos %v800
      %802 = vrot.lane.b32.xlu0 %v800, 127
      %v803 = vpop.permute.xlu0 %802
      %s804 = vtos %v803
      %805 = vrot.lane.b32.xlu0 %v800, 126
      %v806 = vpop.permute.xlu0 %805
      %s807 = vtos %v806
      %808 = vrot.lane.b32.xlu0 %v800, 125
      %v809 = vpop.permute.xlu0 %808
      %s810 = vtos %v809
      %v811 = vstv %s801
      %v812 = vmul.f32 %v811, %v420
      %v813 = vmul.f32 %v811, %v421
      %v814 = vmul.f32 %v811, %v422
      %v815 = vmul.f32 %v811, %v423
      %v816 = vmul.f32 %v811, %v424
      %v817 = vmul.f32 %v811, %v425
      %v818 = vmul.f32 %v811, %v426
      %v819 = vmul.f32 %v811, %v427
      %v820 = vstv %s804
      %v821 = vmul.f32 %v820, %v428
      %v822 = vmul.f32 %v820, %v429
      %v823 = vmul.f32 %v820, %v430
      %v824 = vmul.f32 %v820, %v431
      %v825 = vmul.f32 %v820, %v432
      %v826 = vmul.f32 %v820, %v433
      %v827 = vmul.f32 %v820, %v434
      %v828 = vmul.f32 %v820, %v435
      %v829 = vadd.f32 %v812, %v821
      %v830 = vadd.f32 %v813, %v822
      %v831 = vadd.f32 %v814, %v823
      %v832 = vadd.f32 %v815, %v824
      %v833 = vadd.f32 %v816, %v825
      %v834 = vadd.f32 %v817, %v826
      %v835 = vadd.f32 %v818, %v827
      %v836 = vadd.f32 %v819, %v828
      %v837 = vstv %s807
      %v838 = vmul.f32 %v837, %v444
      %v839 = vmul.f32 %v837, %v445
      %v840 = vmul.f32 %v837, %v446
      %v841 = vmul.f32 %v837, %v447
      %v842 = vmul.f32 %v837, %v448
      %v843 = vmul.f32 %v837, %v449
      %v844 = vmul.f32 %v837, %v450
      %v845 = vmul.f32 %v837, %v451
      %v846 = vadd.f32 %v829, %v838
      %v847 = vadd.f32 %v830, %v839
      %v848 = vadd.f32 %v831, %v840
      %v849 = vadd.f32 %v832, %v841
      %v850 = vadd.f32 %v833, %v842
      %v851 = vadd.f32 %v834, %v843
      %v852 = vadd.f32 %v835, %v844
      %v853 = vadd.f32 %v836, %v845
      %v854 = vstv %s810
      %v855 = vmul.f32 %v854, %v460
      %v856 = vmul.f32 %v854, %v461
      %v857 = vmul.f32 %v854, %v462
      %v858 = vmul.f32 %v854, %v463
      %v859 = vmul.f32 %v854, %v464
      %v860 = vmul.f32 %v854, %v465
      %v861 = vmul.f32 %v854, %v466
      %v862 = vmul.f32 %v854, %v467
      %v863 = vadd.f32 %v846, %v855
      %v864 = vadd.f32 %v847, %v856
      %v865 = vadd.f32 %v848, %v857
      %v866 = vadd.f32 %v849, %v858
      %v867 = vadd.f32 %v850, %v859
      %v868 = vadd.f32 %v851, %v860
      %v869 = vadd.f32 %v852, %v861
      %v870 = vadd.f32 %v853, %v862
      %871 = vst.msk [vmem:[%s419] sm:$0xff] %vm555, %v863
      %872 = vst.msk [vmem:[%s419 + $0x8] sm:$0xff] %vm555, %v864
      %873 = vst.msk [vmem:[%s419 + $0x10] sm:$0xff] %vm555, %v865
      %874 = vst.msk [vmem:[%s419 + $0x18] sm:$0xff] %vm555, %v866
      %875 = vst.msk [vmem:[%s419 + $0x20] sm:$0xff] %vm555, %v867
      %876 = vst.msk [vmem:[%s419 + $0x28] sm:$0xff] %vm555, %v868
      %877 = vst.msk [vmem:[%s419 + $0x30] sm:$0xff] %vm555, %v869
      %878 = vst.msk [vmem:[%s419 + $0x38] sm:$0xff] %vm555, %v870
      %p879 = scmp.lt.s32.totalorder %s21, 1
      %s880 = scalar_select %p879, %s21, 1
      %s881 = smul.addr %s880, 8
      %s882 = smul.addr %s881, 8
      %s883 = scalar_lea.vmem %s10, %s882
      // Predicated region
      $region61: #{tpu_custom_call.1} parent=59 // pred_check
        %p884 = pneg %p269
      $region62: #{tpu_custom_call.1} parent=59 // pred_check_branch
        %886 = sbr.rel (%p884) target = $region64
      $region63: #{tpu_custom_call.1} parent=59 // pred_region
        _
      $region64: #{tpu_custom_call.1} parent=59 // pred_fallthru
        _
    $region60: #{tpu_custom_call.1} parent=5 // pred_fallthru
      _
    %p887 = scmp.le.s32.totalorder 2, %s16
    // Predicated region
    $region65: #{tpu_custom_call.1} parent=5 // pred_check
      %p888 = pneg %p887
    $region66: #{tpu_custom_call.1} parent=5 // pred_check_branch
      %890 = sbr.rel (%p888) target = $region68
    $region67: #{tpu_custom_call.1} parent=5 // pred_region
      %s891 = ssub.s32 %s16, 2
      // Predicated region
      $region69: #{tpu_custom_call.1} parent=67 // pred_check
        %p892 = pneg %p275
      $region70: #{tpu_custom_call.1} parent=67 // pred_check_branch
        %894 = sbr.rel (%p892) target = $region72
      $region71: #{tpu_custom_call.1} parent=67 // pred_region
        %p895 = scmp.lt.s32.totalorder %s22, 1
        %s896 = scalar_select %p895, %s22, 1
        %s897 = smul.addr %s896, 8
        %s898 = smul.addr %s897, 8
        %s899 = scalar_lea.vmem %s10, %s898
      $region72: #{tpu_custom_call.1} parent=67 // pred_fallthru
        _
    $region68: #{tpu_custom_call.1} parent=5 // pred_fallthru
      _
  $region6: #{tpu_custom_call.1} parent=0 // loop_footer
    %s20 = sadd.s32 1, %s16
  $region7: #{tpu_custom_call.1} parent=0 // loop_footer_branch
    %15 = sbr.rel target = $region3
  $region8: #{tpu_custom_call.1} parent=0 // loop_exit
    _

</llo_original>
